<compile_context>
chip_gen: v7x
topology: tpu7x:2x2x1
jax: 0.10.0
libtpu: 0.0.40
codegen_flags: <defaults>
</compile_context>

<pallas_src>
import functools

import jax
import jax.numpy as jnp
from jax import lax
from jax.experimental import pallas as pl
from jax.experimental.pallas import tpu as pltpu

_LANE = 128
_UNROLL_C_MAX = 16  # unroll the channel loop up to this C; fori_loop above


def _sublane_pack(dtype):
    """Rows packed per 32-bit sublane for this dtype (8 f32, 16 bf16, 32 int8)."""
    itemsize = jnp.dtype(dtype).itemsize
    return 8 * max(1, 4 // max(int(itemsize), 1))


def _vmem_capacity_bytes():
    """Per-core VMEM capacity; conservative fallback (v7x per-TC) if unknown."""
    try:
        info = pltpu.get_tpu_info()
        for attr in ("vmem_capacity_bytes", "vmem_bytes", "vmem_size_bytes"):
            v = getattr(info, attr, None)
            if v:
                return int(v)
    except Exception:
        pass
    return 64 * 1024 * 1024


def _lp_contrib(x_slice, p):
    """Per-channel |x|^p contribution, accumulated in f32 (VALU-only for int p)."""
    xf = x_slice.astype(jnp.float32)
    if p == 2:
        return xf * xf
    if p == 1:
        return jnp.abs(xf)
    ax = jnp.abs(xf)
    if float(p) == int(p) and 1 < int(p) <= 8:
        r = ax
        for _ in range(int(p) - 1):
            r = r * ax
        return r
    return ax ** jnp.float32(p)


def _lp_normalize_kernel(x_ref, o_ref, *, p, eps):
    # Block (C, rows, lanes): reduce over axis 0, a *major* dim, so the
    # reduction is dense elementwise VPU adds.  Accumulate one (rows, lanes)
    # f32 channel slice at a time to keep live f32 intermediates small.
    C = x_ref.shape[0]
    if C <= _UNROLL_C_MAX:
        acc = _lp_contrib(x_ref[0], p)
        for c in range(1, C):
            acc = acc + _lp_contrib(x_ref[c], p)
    else:
        def body(c, a):
            return a + _lp_contrib(x_ref[c], p)
        acc = lax.fori_loop(1, C, body, _lp_contrib(x_ref[0], p))

    if p == 2:
        # max(sqrt(ss), eps) == sqrt(max(ss, eps^2))  ->  single EUP rsqrt.
        inv = lax.rsqrt(jnp.maximum(acc, jnp.float32(float(eps) * float(eps))))
    else:
        norm = acc if p == 1 else acc ** jnp.float32(1.0 / p)
        inv = 1.0 / jnp.maximum(norm, jnp.float32(eps))

    x = x_ref[...]
    if o_ref.dtype == jnp.float32:
        o_ref[...] = x * inv[None]
    else:
        # Keep the broadcast scale multiply in the native (e.g. bf16) dtype;
        # only the accumulation above was upcast.
        o_ref[...] = (x * inv[None].astype(x.dtype)).astype(o_ref.dtype)


def _pick_tile_rows(rows, per_row_bytes, pack, budget_bytes, n_outer, min_steps=8):
    """Largest row tile (multiple of `pack`) whose double-buffered in+out blocks
    (+ f32 headroom) fit `budget_bytes`, while keeping >= `min_steps` total grid
    steps so the auto-pipeline can overlap DMA with compute and v7x's two
    TensorCores both get work.  No divisibility requirement: the grid uses
    pl.cdiv and the last block may be partial."""
    if rows <= pack:
        return rows
    by_vmem = (budget_bytes // max(per_row_bytes, 1)) // pack * pack
    tile = max(pack, by_vmem)
    steps_wanted = -(-min_steps // max(int(n_outer), 1))  # ceil
    if steps_wanted > 1:
        cap = -(-rows // steps_wanted)                     # ceil
        cap = max(pack, (cap // pack) * pack)
        tile = min(tile, cap)
    if tile >= rows:
        return rows
    return tile


def lp_normalize(x, p=2, dim=1, eps=1e-12):
    """F.normalize(x, p, dim) for rank-4 (NCHW) input as a Pallas TPU kernel."""
    assert x.ndim == 4, "expected rank-4 (e.g. NCHW) input"
    if dim < 0:
        dim += x.ndim
    if dim != 1:
        # TODO(synk): for non-default dims do the layout change inside the
        # kernel instead of two full HBM transpose passes; dim=1 is the CCVPE
        # hot path.
        x_in = jnp.moveaxis(x, dim, 1)
    else:
        x_in = x

    N, C, H, W = x_in.shape
    HW = H * W
    itemsize = int(jnp.dtype(x.dtype).itemsize)
    pack = _sublane_pack(x.dtype)

    vmem_cap = _vmem_capacity_bytes()
    budget = vmem_cap // 2            # double-buffered in+out blocks + headroom
    vmem_limit = (vmem_cap * 3) // 4  # scoped VMEM limit (<= physical)

    if HW % _LANE == 0:
        # Lane-dense fast path: free reshape (no pad, no extra HBM pass) to
        # (N, C, R, 128); C stays a major dim and stores are unmasked 128-wide.
        R = HW // _LANE
        x_k = x_in.reshape(N, C, R, _LANE)
        rows, lanes = R, _LANE
    else:
        # Remainder path: tile H directly, last block dim = full W.  Still a
        # single HBM read + write; stores are lane-masked only if W < 128.
        x_k = x_in
        rows, lanes = H, W

    # 2x double-buffered input + 2x output blocks at native dtype, plus ~one
    # f32 block of intermediate headroom, per row of the tiled axis.
    per_row_bytes = C * lanes * (4 * itemsize + 4)
    tile_rows = _pick_tile_rows(rows, per_row_bytes, pack, budget, N)
    # TODO(synk): for very large C (block > budget even at tile_rows == pack),
    # add a C-tiled grid axis ("arbitrary") with a VMEM scratch accumulator.

    grid = (N, pl.cdiv(rows, tile_rows))
    block = (None, C, tile_rows, lanes)  # batch dim squeezed out of the kernel

    kernel = functools.partial(_lp_normalize_kernel, p=p, eps=eps)
    out_k = pl.pallas_call(
        kernel,
        out_shape=jax.ShapeDtypeStruct(x_k.shape, x.dtype),
        grid_spec=pltpu.PrefetchScalarGridSpec(
            num_scalar_prefetch=0,
            grid=grid,
            in_specs=[pl.BlockSpec(block, lambda n, r: (n, 0, r, 0))],
            out_specs=pl.BlockSpec(block, lambda n, r: (n, 0, r, 0)),
        ),
        compiler_params=pltpu.CompilerParams(
            dimension_semantics=("parallel", "parallel"),
            vmem_limit_bytes=int(vmem_limit),
        ),
    )(x_k)

    out = out_k.reshape(N, C, H, W)
    if dim != 1:
        out = jnp.moveaxis(out, 1, dim)
    return out


if __name__ == "__main__":
    key = jax.random.PRNGKey(0)
    eps = 1e-12

    def ref_normalize(x, p, dim, eps):
        xf = x.astype(jnp.float32)
        if p == 2:
            norm = jnp.sqrt(jnp.sum(xf * xf, axis=dim, keepdims=True))
        elif p == 1:
            norm = jnp.sum(jnp.abs(xf), axis=dim, keepdims=True)
        else:
            norm = jnp.sum(jnp.abs(xf) ** p, axis=dim, keepdims=True) ** (1.0 / p)
        return (xf / jnp.maximum(norm, eps)).astype(x.dtype)

    # CCVPE hot path: p=2, dim=1, NCHW, HW a multiple of 128 (lane-dense path).
    x = jax.random.normal(key, (2, 4, 16, 16), dtype=jnp.float32)
    out = jax.block_until_ready(lp_normalize(x, p=2, dim=1, eps=eps))
    assert jnp.allclose(out, ref_normalize(x, 2, 1, eps), atol=1e-5, rtol=1e-5)

    # p=1 branch.
    out1 = jax.block_until_ready(lp_normalize(x, p=1, dim=1, eps=eps))
    assert jnp.allclose(out1, ref_normalize(x, 1, 1, eps), atol=1e-5, rtol=1e-5)

    k1, k2, k3, k4 = jax.random.split(key, 4)

    # Partial edge block on the lane-dense path (R=13 rows, tile does not divide).
    xp = jax.random.normal(k1, (1, 4, 13, 128), dtype=jnp.float32)
    outp = jax.block_until_ready(lp_normalize(xp, p=2, dim=1, eps=eps))
    assert jnp.allclose(outp, ref_normalize(xp, 2, 1, eps), atol=1e-5, rtol=1e-5)

    # HW % 128 != 0: NCHW remainder path (no host-side pad / slice passes).
    xr = jax.random.normal(k2, (2, 4, 10, 12), dtype=jnp.float32)
    outr = jax.block_until_ready(lp_normalize(xr, p=2, dim=1, eps=eps))
    assert jnp.allclose(outr, ref_normalize(xr, 2, 1, eps), atol=1e-5, rtol=1e-5)

    # C > unroll threshold: fori_loop channel-accumulation path.
    xc = jax.random.normal(k3, (1, 20, 16, 16), dtype=jnp.float32)
    outc = jax.block_until_ready(lp_normalize(xc, p=2, dim=1, eps=eps))
    assert jnp.allclose(outc, ref_normalize(xc, 2, 1, eps), atol=1e-5, rtol=1e-5)

    # bf16 activations (sublane packing = 16; scale multiply in bf16).
    xb = jax.random.normal(k4, (2, 4, 16, 16), dtype=jnp.bfloat16)
    outb = jax.block_until_ready(lp_normalize(xb, p=2, dim=1, eps=eps))
    assert jnp.allclose(outb.astype(jnp.float32),
                        ref_normalize(xb, 2, 1, eps).astype(jnp.float32),
                        atol=3e-2, rtol=3e-2)

    print("KERNEL_OK")
</pallas_src>

<mosaic_0001>
module attributes {stable_mosaic.version = 11 : i64} {
  func.func @_lp_normalize_kernel(%arg0: i32, %arg1: i32, %arg2: memref<1x4x2x128xf32, #tpu.memory_space<vmem>>, %arg3: memref<1x4x2x128xf32, #tpu.memory_space<vmem>>) attributes {dimension_semantics = [#tpu.dimension_semantics<parallel>, #tpu.dimension_semantics<parallel>], iteration_bounds = array<i64: 2, 1>, scalar_prefetch = 0 : i64, scratch_operands = 0 : i64, tpu.core_type = #tpu.core_type<tc>, window_params = [{transform_indices = @transform_0, window_bounds = array<i64: 1, 4, 2, 128>}, {transform_indices = @transform_1, window_bounds = array<i64: 1, 4, 2, 128>}]} {
    %c0 = arith.constant 0 : index
    %c0_0 = arith.constant 0 : index
    %c0_1 = arith.constant 0 : index
    %c0_2 = arith.constant 0 : index
    %0 = vector.load %arg2[%c0, %c0_0, %c0_1, %c0_2] : memref<1x4x2x128xf32, #tpu.memory_space<vmem>>, vector<1x1x2x128xf32>
    %1 = vector.shape_cast %0 : vector<1x1x2x128xf32> to vector<2x128xf32>
    %2 = arith.mulf %1, %1 : vector<2x128xf32>
    %c0_3 = arith.constant 0 : index
    %c1 = arith.constant 1 : index
    %c0_4 = arith.constant 0 : index
    %c0_5 = arith.constant 0 : index
    %3 = vector.load %arg2[%c0_3, %c1, %c0_4, %c0_5] : memref<1x4x2x128xf32, #tpu.memory_space<vmem>>, vector<1x1x2x128xf32>
    %4 = vector.shape_cast %3 : vector<1x1x2x128xf32> to vector<2x128xf32>
    %5 = arith.mulf %4, %4 : vector<2x128xf32>
    %6 = arith.addf %2, %5 : vector<2x128xf32>
    %c0_6 = arith.constant 0 : index
    %c2 = arith.constant 2 : index
    %c0_7 = arith.constant 0 : index
    %c0_8 = arith.constant 0 : index
    %7 = vector.load %arg2[%c0_6, %c2, %c0_7, %c0_8] : memref<1x4x2x128xf32, #tpu.memory_space<vmem>>, vector<1x1x2x128xf32>
    %8 = vector.shape_cast %7 : vector<1x1x2x128xf32> to vector<2x128xf32>
    %9 = arith.mulf %8, %8 : vector<2x128xf32>
    %10 = arith.addf %6, %9 : vector<2x128xf32>
    %c0_9 = arith.constant 0 : index
    %c3 = arith.constant 3 : index
    %c0_10 = arith.constant 0 : index
    %c0_11 = arith.constant 0 : index
    %11 = vector.load %arg2[%c0_9, %c3, %c0_10, %c0_11] : memref<1x4x2x128xf32, #tpu.memory_space<vmem>>, vector<1x1x2x128xf32>
    %12 = vector.shape_cast %11 : vector<1x1x2x128xf32> to vector<2x128xf32>
    %13 = arith.mulf %12, %12 : vector<2x128xf32>
    %14 = arith.addf %10, %13 : vector<2x128xf32>
    %cst = arith.constant 1.000000e-24 : f32
    %15 = vector.broadcast %cst : f32 to vector<2x128xf32>
    %16 = arith.maximumf %14, %15 : vector<2x128xf32>
    %17 = math.rsqrt %16 : vector<2x128xf32>
    %c0_12 = arith.constant 0 : index
    %c0_13 = arith.constant 0 : index
    %c0_14 = arith.constant 0 : index
    %c0_15 = arith.constant 0 : index
    %18 = vector.load %arg2[%c0_12, %c0_13, %c0_14, %c0_15] : memref<1x4x2x128xf32, #tpu.memory_space<vmem>>, vector<1x4x2x128xf32>
    %19 = vector.shape_cast %18 : vector<1x4x2x128xf32> to vector<4x2x128xf32>
    %20 = vector.shape_cast %17 : vector<2x128xf32> to vector<1x2x128xf32>
    %21 = vector.broadcast %20 : vector<1x2x128xf32> to vector<4x2x128xf32>
    %22 = arith.mulf %19, %21 : vector<4x2x128xf32>
    %c0_16 = arith.constant 0 : index
    %c0_17 = arith.constant 0 : index
    %c0_18 = arith.constant 0 : index
    %c0_19 = arith.constant 0 : index
    %23 = vector.load %arg3[%c0_16, %c0_17, %c0_18, %c0_19] : memref<1x4x2x128xf32, #tpu.memory_space<vmem>>, vector<1x4x2x128xf32>
    %24 = vector.shape_cast %23 : vector<1x4x2x128xf32> to vector<4x2x128xf32>
    %25 = vector.shape_cast %22 : vector<4x2x128xf32> to vector<1x4x2x128xf32>
    tpu.vector_store %arg3[%c0_16, %c0_17, %c0_18, %c0_19], %25 {strides = array<i32>} : memref<1x4x2x128xf32, #tpu.memory_space<vmem>>, vector<1x4x2x128xf32>,
    return
  }
  func.func @transform_0(%arg0: i32, %arg1: i32) -> (i32, i32, i32, i32) {
    %c0_i32 = arith.constant 0 : i32
    %c0_i32_0 = arith.constant 0 : i32
    %c0_i32_1 = arith.constant 0 : i32
    return %arg0, %c0_i32, %arg1, %c0_i32_0 : i32, i32, i32, i32
  }
  func.func @transform_1(%arg0: i32, %arg1: i32) -> (i32, i32, i32, i32) {
    %c0_i32 = arith.constant 0 : i32
    %c0_i32_0 = arith.constant 0 : i32
    %c0_i32_1 = arith.constant 0 : i32
    return %arg0, %c0_i32, %arg1, %c0_i32_0 : i32, i32, i32, i32
  }
}

</mosaic_0001>

<llo_original>
// kernel: tpu_custom_call.1
$region0: #{tpu_custom_call.1}
  #allocation0 [shape = 'u32[]', space=smem, size = 0x4, offset = 0x4, fixed_abs, tag = 'smem constant byte address 0x4 - core index']
  #allocation1 [shape = 'u32[144,128]{1,0:T(1,128)}', space=vmem, size = 0x12000, scoped, tag = 'internal scratch']
  %s0 = inlined_call_operand.hbm [shape: f32[2,4,2,128], index: 0, kind: input, shape index: {}]
  %s1 = inlined_call_operand.hbm [shape: f32[2,4,2,128], index: 1, kind: output, shape index: {}]
  %s2 = sld [smem:[#allocation0]]
  $region41: #{tpu_custom_call.1} parent=0
    _
  %s4 = ssub.s32 1, %s2
  %s5 = scalar_select 0, %s4, %s2
  $region1: #{tpu_custom_call.1} parent=0
    #allocation2 [shape = 'u8[8192]{0}', space=vmem, size = 0x2000, scoped, tag = 'input window, operand 0']
    #allocation3 [shape = 's32[2]{0}', space=sflag, size = 0x8, scoped, tag = 'scoped memory for tpu_custom_call.1']
    #allocation4 [shape = 's32[2]{0}', space=sflag, size = 0x8, scoped, tag = 'scoped memory for tpu_custom_call.1']
    #allocation5 [shape = 'u8[8192]{0}', space=vmem, size = 0x2000, scoped, tag = 'output window, operand 0']
    %6 = vsyncpa [#allocation3], 0
    %s7 = scalar_lea.sflag [#allocation3], 1
    %8 = vsyncpa %s7, 0
    %9 = vsyncpa [#allocation4], 0
    %s10 = scalar_lea.sflag [#allocation4], 1
    %11 = vsyncpa %s10, 0
    loop: start=0, step=1, limit=4
    $region2: #{tpu_custom_call.1} parent=1 // loop_pre_header
      _
    $region3: #{tpu_custom_call.1} parent=1 // loop_header
      %s13 = sphi 0, %s17
      %p14 = scmp.ge.s32.totalorder %s13, 4
      %s20 = sphi 0, %s32
      %s21 = sphi 0, %s28
      %s22 = sphi 0, %s20
      %s23 = sphi 0, %s21
      %s24 = sphi 0, %s22
      %s25 = sphi 0, %s23
      %s37 = sphi 0, %s39
      %s40 = sphi 0, %s37
      %s41 = sphi 0, %s40
      %s57 = sphi 0, %s41
      %s65 = sphi 0, %s67
      %s68 = sphi 0, %s65
      %s69 = sphi 0, %s68
      %s85 = sphi 0, %s69
    $region4: #{tpu_custom_call.1} parent=1 // loop_header_branch
      %16 = sbr.rel (%p14) target = $region8
    $region5: #{tpu_custom_call.1} parent=1 // loop_body
      %s18 = ssub.s32 %s13, 1
      %s19 = ssub.s32 %s13, 2
      %s26 = sadd.s32 1, %s21
      %p27 = scmp.ge.s32.totalorder %s26, 1
      %s28 = scalar_select %p27, 0, %s26
      %s29 = sadd.s32 1, %s20
      %s30 = scalar_select %p27, %s29, %s20
      %p31 = scmp.ge.s32.totalorder %s30, 2
      %s32 = scalar_select %p31, 0, %s30
      %s33 = ssub.s32 %s20, %s32
      %s34 = ssub.s32 %s21, %s28
      %s35 = sor.u32 %s33, %s34
      %p36 = scmp.eq.s32.totalorder %s35, 0
      %s38 = sadd.s32 %s37, 1
      %s39 = scalar_select %p36, %s37, %s38
      %p42 = pneg %p36
      %p43 = scmp.eq.s32.totalorder %s13, 1
      %p44 = por %p42, %p43
      %p45 = scmp.ne.s32.totalorder %s37, %s40
      %p46 = scmp.eq.s32.totalorder %s13, 0
      %p47 = por %p45, %p46
      %p48 = scmp.ne.s32.totalorder %s37, %s40
      %p49 = scmp.eq.s32.totalorder %s18, 1
      %p50 = por %p48, %p49
      %p51 = scmp.ne.s32.totalorder %s40, %s41
      %p52 = scmp.eq.s32.totalorder %s18, 0
      %p53 = por %p51, %p52
      %p54 = scmp.ne.s32.totalorder %s40, %s41
      %p55 = scmp.eq.s32.totalorder %s19, 1
      %p56 = por %p54, %p55
      %p58 = scmp.ne.s32.totalorder %s41, %s57
      %p59 = scmp.eq.s32.totalorder %s19, 0
      %p60 = por %p58, %p59
      %s61 = ssub.s32 %s20, %s32
      %s62 = ssub.s32 %s21, %s28
      %s63 = sor.u32 %s61, %s62
      %p64 = scmp.eq.s32.totalorder %s63, 0
      %s66 = sadd.s32 %s65, 1
      %s67 = scalar_select %p64, %s65, %s66
      %p70 = pneg %p64
      %p71 = scmp.eq.s32.totalorder %s13, 1
      %p72 = por %p70, %p71
      %p73 = scmp.ne.s32.totalorder %s65, %s68
      %p74 = scmp.eq.s32.totalorder %s13, 0
      %p75 = por %p73, %p74
      %p76 = scmp.ne.s32.totalorder %s65, %s68
      %p77 = scmp.eq.s32.totalorder %s18, 1
      %p78 = por %p76, %p77
      %p79 = scmp.ne.s32.totalorder %s68, %s69
      %p80 = scmp.eq.s32.totalorder %s18, 0
      %p81 = por %p79, %p80
      %p82 = scmp.ne.s32.totalorder %s68, %s69
      %p83 = scmp.eq.s32.totalorder %s19, 1
      %p84 = por %p82, %p83
      %p86 = scmp.ne.s32.totalorder %s69, %s85
      %p87 = scmp.eq.s32.totalorder %s19, 0
      %p88 = por %p86, %p87
      %p89 = scmp.le.s32.totalorder 1, %s13
      %p90 = scmp.lt.s32.totalorder %s13, 3
      %p91 = pnand %p89, %p90
      %p92 = pneg %p91
      // Predicated region
      $region9: #{tpu_custom_call.1} parent=5 // pred_check
        _
      $region10: #{tpu_custom_call.1} parent=5 // pred_check_branch
        %94 = sbr.rel (%p91) target = $region12
      $region11: #{tpu_custom_call.1} parent=5 // pred_region
        %s95 = ssub.s32 %s13, 1
      $region12: #{tpu_custom_call.1} parent=5 // pred_fallthru
        _
      %p96 = scmp.lt.s32.totalorder %s13, 2
      // Predicated region
      $region13: #{tpu_custom_call.1} parent=5 // pred_check
        %p97 = pneg %p96
      $region14: #{tpu_custom_call.1} parent=5 // pred_check_branch
        %99 = sbr.rel (%p97) target = $region16
      $region15: #{tpu_custom_call.1} parent=5 // pred_region
        // Predicated region
        $region17: #{tpu_custom_call.1} parent=15 // pred_check
          %p100 = pneg %p47
        $region18: #{tpu_custom_call.1} parent=15 // pred_check_branch
          %102 = sbr.rel (%p100) target = $region20
        $region19: #{tpu_custom_call.1} parent=15 // pred_region
          %s103 = sand.u32 %s37, 1
          %s104 = scalar_lea.sflag [#allocation3], %s103
          %s105 = sand.u32 %s37, 1
          %s106 = smul.addr %s105, 8
          %s107 = scalar_lea.vmem [#allocation2], %s106
          %s109 = ssub.s32 128, 128
          %110 = vsyncadd %s104, %s109
          %s111 = smul.addr %s20, 4
          %s112 = sadd.s32 %s21, %s111
          %s113 = smul.addr %s112, 32
          %s114 = scalar_lea.hbm %s0, %s113
          %s115 = sshll.u32 %s107, 4
          %s116 = int_to_ptr.vmem [resolvable:$true] %s115
          %121 = dma.hbm_to_vmem [thread:$0]  %s114, 128, %s116, %s104, 32, 32, 2
        $region20: #{tpu_custom_call.1} parent=15 // pred_fallthru
          _
      $region16: #{tpu_custom_call.1} parent=5 // pred_fallthru
        _
      %p122 = scmp.le.s32.totalorder 1, %s13
      %p123 = scmp.lt.s32.totalorder %s13, 3
      %p124 = pnand %p122, %p123
      %p125 = pneg %p124
      // Predicated region
      $region21: #{tpu_custom_call.1} parent=5 // pred_check
        _
      $region22: #{tpu_custom_call.1} parent=5 // pred_check_branch
        %127 = sbr.rel (%p124) target = $region24
      $region23: #{tpu_custom_call.1} parent=5 // pred_region
        %s128 = ssub.s32 %s13, 1
        %s129 = sand.u32 %s40, 1
        %s130 = scalar_lea.sflag [#allocation3], %s129
        %s131 = sand.u32 %s40, 1
        %s132 = smul.addr %s131, 8
        %s133 = scalar_lea.vmem [#allocation2], %s132
        // Predicated region
        $region25: #{tpu_custom_call.1} parent=23 // pred_check
          %p134 = pneg %p53
        $region26: #{tpu_custom_call.1} parent=23 // pred_check_branch
          %136 = sbr.rel (%p134) target = $region28
        $region27: #{tpu_custom_call.1} parent=23 // pred_region
          %137 = dma.done %s130, 128
        $region28: #{tpu_custom_call.1} parent=23 // pred_fallthru
          _
        %s138 = sand.u32 %s40, 1
        %s139 = scalar_lea.sflag [#allocation3], %s138
        %s140 = sand.u32 %s40, 1
        %s141 = smul.addr %s140, 8
        %s142 = scalar_lea.vmem [#allocation2], %s141
        %p143 = pneg %p53
        %p144 = pneg %p50
        %p145 = pneg %p81
        %p146 = pneg %p78
        %s147 = sand.u32 %s68, 1
        %s148 = scalar_lea.sflag [#allocation4], %s147
        %s149 = sand.u32 %s68, 1
        %s150 = smul.addr %s149, 8
        %s151 = scalar_lea.vmem [#allocation5], %s150
        %v152 = vld [vmem:[%s133] sm:$0x3]
        %v153 = vmul.f32 %v152, %v152
        %s154 = scalar_lea.vmem %s133, 2 [#allocation2]
        %v155 = vld [vmem:[%s154] sm:$0x3]
        %v156 = vmul.f32 %v155, %v155
        %v157 = vadd.f32 %v153, %v156
        %s158 = scalar_lea.vmem %s133, 4 [#allocation2]
        %v159 = vld [vmem:[%s158] sm:$0x3]
        %v160 = vmul.f32 %v159, %v159
        %v161 = vadd.f32 %v157, %v160
        %s162 = scalar_lea.vmem %s133, 6 [#allocation2]
        %v163 = vld [vmem:[%s162] sm:$0x3]
        %v164 = vmul.f32 %v163, %v163
        %v165 = vadd.f32 %v161, %v164
        %v166 = vmax.f32 %v165, 1e-24
        %v167 = vrsqrt.pop %v166
        %v168 = vld [vmem:[%s133] sm:$0x3]
        %v169 = vld [vmem:[%s133 + $0x2] sm:$0x3]
        %v170 = vld [vmem:[%s133 + $0x4] sm:$0x3]
        %v171 = vld [vmem:[%s133 + $0x6] sm:$0x3]
        %v172 = vmul.f32 %v168, %v167
        %v173 = vmul.f32 %v169, %v167
        %v174 = vmul.f32 %v170, %v167
        %v175 = vmul.f32 %v171, %v167
        %176 = vst [vmem:[%s151] sm:$0x3] %v172
        %177 = vst [vmem:[%s151 + $0x2] sm:$0x3] %v173
        %178 = vst [vmem:[%s151 + $0x4] sm:$0x3] %v174
        %179 = vst [vmem:[%s151 + $0x6] sm:$0x3] %v175
        %s180 = sand.u32 %s68, 1
        %s181 = scalar_lea.sflag [#allocation4], %s180
        %s182 = sand.u32 %s68, 1
        %s183 = smul.addr %s182, 8
        %s184 = scalar_lea.vmem [#allocation5], %s183
        // Predicated region
        $region29: #{tpu_custom_call.1} parent=23 // pred_check
          %p185 = pneg %p78
        $region30: #{tpu_custom_call.1} parent=23 // pred_check_branch
          %187 = sbr.rel (%p185) target = $region32
        $region31: #{tpu_custom_call.1} parent=23 // pred_region
          %s189 = ssub.s32 128, 128
          %190 = vsyncadd %s181, %s189
          %s191 = smul.addr %s22, 4
          %s192 = sadd.s32 %s23, %s191
          %s193 = smul.addr %s192, 32
          %s194 = scalar_lea.hbm %s1, %s193
          %s195 = sshll.u32 %s184, 4
          %s196 = int_to_ptr.vmem [resolvable:$true] %s195
          %201 = dma.vmem_to_hbm [thread:$0]  %s196, 128, %s194, %s181, 32, 32, 2
        $region32: #{tpu_custom_call.1} parent=23 // pred_fallthru
          _
      $region24: #{tpu_custom_call.1} parent=5 // pred_fallthru
        _
      %p202 = scmp.le.s32.totalorder 2, %s13
      // Predicated region
      $region33: #{tpu_custom_call.1} parent=5 // pred_check
        %p203 = pneg %p202
      $region34: #{tpu_custom_call.1} parent=5 // pred_check_branch
        %205 = sbr.rel (%p203) target = $region36
      $region35: #{tpu_custom_call.1} parent=5 // pred_region
        %s206 = ssub.s32 %s13, 2
        // Predicated region
        $region37: #{tpu_custom_call.1} parent=35 // pred_check
          %p207 = pneg %p84
        $region38: #{tpu_custom_call.1} parent=35 // pred_check_branch
          %209 = sbr.rel (%p207) target = $region40
        $region39: #{tpu_custom_call.1} parent=35 // pred_region
          %s210 = sand.u32 %s69, 1
          %s211 = scalar_lea.sflag [#allocation4], %s210
          %s212 = sand.u32 %s69, 1
          %s213 = smul.addr %s212, 8
          %s214 = scalar_lea.vmem [#allocation5], %s213
          %215 = dma.done %s211, 128
        $region40: #{tpu_custom_call.1} parent=35 // pred_fallthru
          _
      $region36: #{tpu_custom_call.1} parent=5 // pred_fallthru
        _
    $region6: #{tpu_custom_call.1} parent=1 // loop_footer
      %s17 = sadd.s32 1, %s13
    $region7: #{tpu_custom_call.1} parent=1 // loop_footer_branch
      %12 = sbr.rel target = $region3
    $region8: #{tpu_custom_call.1} parent=1 // loop_exit
      _
    %216 = vsyncpa [#allocation3], 1
    %s217 = scalar_lea.sflag [#allocation3], 1
    %218 = vsyncpa %s217, 1
    %219 = vsyncpa [#allocation4], 1
    %s220 = scalar_lea.sflag [#allocation4], 1
    %221 = vsyncpa %s220, 1

</llo_original>
